<compile_context>
chip_gen: v5e
topology: v5e:2x2
jax: 0.10.0
libtpu: 0.0.40
codegen_flags: <defaults>
</compile_context>

<pallas_src>
import jax
import jax.numpy as jnp
from jax.experimental import pallas as pl
from jax.experimental.pallas import tpu as pltpu


# ----------------------------------------------------------------------------
# Kernel: one batch tile of packed rows.
#   x_ref  : [TBP, pack*In]   (pack batch rows per lane-dense row)
#   w1_ref : [pack*In, pack*H]   block-diagonal fc1 weight
#   b1_ref : [1, pack*H]         fc1 bias tiled `pack` times
#   w2_ref : [pack*H, pack*O]    block-diagonal mu_layer weight
#   b2_ref : [1, pack*O]         mu bias tiled `pack` times
#   mu_ref : [TBP, pack*O]
# ----------------------------------------------------------------------------
def con_actor_kernel(x_ref, w1_ref, b1_ref, w2_ref, b2_ref, mu_ref):
    x = x_ref[...].astype(jnp.float32)          # allows bf16-streamed x
    h = jnp.tanh(
        jnp.dot(x, w1_ref[...], preferred_element_type=jnp.float32) + b1_ref[...]
    )
    mu_ref[...] = (
        jnp.dot(h, w2_ref[...], preferred_element_type=jnp.float32) + b2_ref[...]
    ).astype(mu_ref.dtype)


def _round_up(n, m):
    return ((n + m - 1) // m) * m


def _block_diag(w, reps):
    """[i, o] -> [reps*i, reps*o] with `w` repeated along the diagonal."""
    if reps == 1:
        return w
    i, o = w.shape
    eye = jnp.eye(reps, dtype=w.dtype)
    return (eye[:, None, :, None] * w[None, :, None, :]).reshape(reps * i, reps * o)


# ----------------------------------------------------------------------------
# Wrapper
# ----------------------------------------------------------------------------
def con_actor_forward(x, params, *, block_b=4096):
    """ConActor.forward: x [B, In] -> (mu [B, O] float32, std [1, O])."""
    w1, b1 = params["w1"], params["b1"]          # [In, H], [1, H]
    w2, b2 = params["w2"], params["b2"]          # [H, O],  [1, O]
    log_std = params["log_std"]                  # [1, O]

    B, In = x.shape
    H = w1.shape[1]
    O = w2.shape[1]

    # Lane-dense packing factor: `pack` consecutive batch rows share one
    # (near-)128-lane row.  In=16 -> pack=8 -> exactly 128 lanes.
    pack = max(1, 128 // In)

    # Pad only to a multiple of `pack` (usually a no-op).  Padded rows are
    # zeros -> contribute exactly 0 through the block-diagonal weights.
    Bp = _round_up(B, pack)
    if Bp != B:
        x = jnp.pad(x, ((0, Bp - B), (0, 0)))
    bpk = Bp // pack
    xp = x.reshape(bpk, pack * In)               # free contiguous reshape

    # Packed (block-diagonal) weights: tiny, VMEM-resident across the grid.
    # (Intended regime: small MLP heads; for very large H/In skip packing.)
    w1p = _block_diag(w1, pack)                  # [pack*In, pack*H]
    w2p = _block_diag(w2, pack)                  # [pack*H,  pack*O]
    b1p = jnp.tile(b1, (1, pack))                # [1, pack*H]
    b2p = jnp.tile(b2, (1, pack))                # [1, pack*O]

    # Tile selection (in packed rows).  Large tiles amortize the ~0.35us
    # per-grid-step overhead; the second term keeps >=4 tiles when possible so
    # v7x's two TensorCores both get work ("parallel" batch axis).
    tbp_cap = max(8, (block_b // pack) // 8 * 8)
    tbp = min(tbp_cap, _round_up(pl.cdiv(bpk, 4), 8))
    if tbp >= bpk:
        tbp = bpk                                # single block == full extent
    grid = (pl.cdiv(bpk, tbp),)                  # ragged last block is masked

    flops = 2 * Bp * (In * H + H * O)
    bytes_accessed = (
        xp.size * xp.dtype.itemsize
        + Bp * O * 4
        + 4 * (w1p.size + w2p.size + b1p.size + b2p.size)
    )

    mu_packed = pl.pallas_call(
        con_actor_kernel,
        out_shape=jax.ShapeDtypeStruct((bpk, pack * O), jnp.float32),
        grid=grid,
        in_specs=[
            pl.BlockSpec((tbp, pack * In), lambda i: (i, 0)),     # x: streamed tiles
            pl.BlockSpec((pack * In, pack * H), lambda i: (0, 0)),  # W1bd: resident
            pl.BlockSpec((1, pack * H), lambda i: (0, 0)),          # b1:   resident
            pl.BlockSpec((pack * H, pack * O), lambda i: (0, 0)),   # W2bd: resident
            pl.BlockSpec((1, pack * O), lambda i: (0, 0)),          # b2:   resident
        ],
        out_specs=pl.BlockSpec((tbp, pack * O), lambda i: (i, 0)),
        compiler_params=pltpu.CompilerParams(
            dimension_semantics=("parallel",),   # split batch tiles across TCs (v7x)
        ),
        cost_estimate=pl.CostEstimate(
            flops=flops, transcendentals=Bp * H, bytes_accessed=bytes_accessed
        ),
    )(xp, w1p, b1p, w2p, b2p)

    mu = mu_packed.reshape(Bp, O)                # free contiguous reshape back
    if Bp != B:
        mu = mu[:B]
    std = jnp.exp(log_std)                       # batch-independent [1, O]
    return mu, std


# ----------------------------------------------------------------------------
# Parameter init (same scheme as the PyTorch module)
# ----------------------------------------------------------------------------
def orthogonal(key, shape, gain=1.0):
    """Orthogonal init matching nn.init.orthogonal_ semantics."""
    rows, cols = shape
    n_big, n_small = max(rows, cols), min(rows, cols)
    a = jax.random.normal(key, (n_big, n_small), dtype=jnp.float32)
    q, r = jnp.linalg.qr(a)
    d = jnp.sign(jnp.diagonal(r))
    q = q * d[None, :]
    if rows < cols:
        q = q.T
    return gain * q[:rows, :cols]


def init_con_actor_params(key, input_size, hidden_size, output_size):
    k1, k2 = jax.random.split(key, 2)
    # PyTorch Linear weight is [out, in]; orthogonal init acts on that shape.
    w1_t = orthogonal(k1, (hidden_size, input_size), gain=1.0)    # fc1.weight
    w2_t = orthogonal(k2, (output_size, hidden_size), gain=0.01)  # mu_layer.weight
    return {
        # pre-transposed to [in, out]; biases as [1, out]
        "w1": w1_t.T, "b1": jnp.zeros((1, hidden_size), jnp.float32),
        "w2": w2_t.T, "b2": jnp.zeros((1, output_size), jnp.float32),
        "log_std": jnp.zeros((1, output_size), jnp.float32),
    }


# ----------------------------------------------------------------------------
# Demo / self-check
# ----------------------------------------------------------------------------
if __name__ == "__main__":
    key = jax.random.PRNGKey(0)
    k_param, k1, k2, k3 = jax.random.split(key, 4)

    input_size, hidden_size, output_size = 16, 32, 8
    params = init_con_actor_params(k_param, input_size, hidden_size, output_size)

    def ref(x, p):
        h = jnp.tanh(
            jnp.dot(x, p["w1"], precision=jax.lax.Precision.HIGHEST) + p["b1"]
        )
        mu = jnp.dot(h, p["w2"], precision=jax.lax.Precision.HIGHEST) + p["b2"]
        return mu, jnp.exp(p["log_std"])

    # Case 1: single block (block == full extent).
    x1 = jax.random.normal(k1, (64, input_size), dtype=jnp.float32)
    mu1, std1 = jax.block_until_ready(con_actor_forward(x1, params))
    mu1_ref, std1_ref = ref(x1, params)
    assert mu1.shape == (64, output_size) and std1.shape == (1, output_size)
    assert jnp.allclose(mu1, mu1_ref, atol=1e-4, rtol=1e-4)
    assert jnp.allclose(std1, std1_ref, atol=1e-6)

    # Case 2: multi-tile ragged grid (no pad: B divisible by pack=8; 4 tiles,
    # last one ragged and masked by Pallas).
    x2 = jax.random.normal(k2, (600, input_size), dtype=jnp.float32)
    mu2, _ = jax.block_until_ready(con_actor_forward(x2, params, block_b=512))
    mu2_ref, _ = ref(x2, params)
    assert mu2.shape == (600, output_size)
    assert jnp.allclose(mu2, mu2_ref, atol=1e-4, rtol=1e-4)

    # Case 3: B not a multiple of the packing factor (pads to 16, slices back).
    x3 = jax.random.normal(k3, (10, input_size), dtype=jnp.float32)
    mu3, _ = jax.block_until_ready(con_actor_forward(x3, params))
    mu3_ref, _ = ref(x3, params)
    assert mu3.shape == (10, output_size)
    assert jnp.allclose(mu3, mu3_ref, atol=1e-4, rtol=1e-4)

    print("KERNEL_OK")
</pallas_src>

<mosaic_0001>
module attributes {stable_mosaic.version = 11 : i64} {
  func.func @con_actor_kernel(%arg0: i32, %arg1: memref<8x128xf32, #tpu.memory_space<vmem>>, %arg2: memref<128x256xf32, #tpu.memory_space<vmem>>, %arg3: memref<1x256xf32, #tpu.memory_space<vmem>>, %arg4: memref<256x64xf32, #tpu.memory_space<vmem>>, %arg5: memref<1x64xf32, #tpu.memory_space<vmem>>, %arg6: memref<8x64xf32, #tpu.memory_space<vmem>>) attributes {dimension_semantics = [#tpu.dimension_semantics<parallel>], iteration_bounds = array<i64: 1>, scalar_prefetch = 0 : i64, scratch_operands = 0 : i64, tpu.core_type = #tpu.core_type<tc>, window_params = [{transform_indices = @transform_0, window_bounds = array<i64: 8, 128>}, {pipeline_mode = #tpu.pipeline_mode<synchronous>, transform_indices = @transform_1, window_bounds = array<i64: 128, 256>}, {pipeline_mode = #tpu.pipeline_mode<synchronous>, transform_indices = @transform_2, window_bounds = array<i64: 1, 256>}, {pipeline_mode = #tpu.pipeline_mode<synchronous>, transform_indices = @transform_3, window_bounds = array<i64: 256, 64>}, {pipeline_mode = #tpu.pipeline_mode<synchronous>, transform_indices = @transform_4, window_bounds = array<i64: 1, 64>}, {transform_indices = @transform_5, window_bounds = array<i64: 8, 64>}]} {
    %c0 = arith.constant 0 : index
    %c0_0 = arith.constant 0 : index
    %0 = vector.load %arg1[%c0, %c0_0] : memref<8x128xf32, #tpu.memory_space<vmem>>, vector<8x128xf32>
    %c0_1 = arith.constant 0 : index
    %c0_2 = arith.constant 0 : index
    %1 = vector.load %arg2[%c0_1, %c0_2] : memref<128x256xf32, #tpu.memory_space<vmem>>, vector<128x256xf32>
    %cst = arith.constant dense<0.000000e+00> : vector<8x256xf32>
    %2 = tpu.matmul %0, %1, %cst {dimension_numbers = #tpu.dot_dimension_numbers<[1], [0], [0], [1], [0, 0, 1, 1], [], []>} : vector<8x128xf32>, vector<128x256xf32>, vector<8x256xf32> -> vector<8x256xf32>
    %c0_3 = arith.constant 0 : index
    %c0_4 = arith.constant 0 : index
    %3 = vector.load %arg3[%c0_3, %c0_4] : memref<1x256xf32, #tpu.memory_space<vmem>>, vector<1x256xf32>
    %4 = vector.broadcast %3 : vector<1x256xf32> to vector<8x256xf32>
    %5 = arith.addf %2, %4 : vector<8x256xf32>
    %6 = math.tanh %5 : vector<8x256xf32>
    %c0_5 = arith.constant 0 : index
    %c0_6 = arith.constant 0 : index
    %7 = vector.load %arg4[%c0_5, %c0_6] : memref<256x64xf32, #tpu.memory_space<vmem>>, vector<256x64xf32>
    %cst_7 = arith.constant dense<0.000000e+00> : vector<8x64xf32>
    %8 = tpu.matmul %6, %7, %cst_7 {dimension_numbers = #tpu.dot_dimension_numbers<[1], [0], [0], [1], [0, 0, 1, 1], [], []>} : vector<8x256xf32>, vector<256x64xf32>, vector<8x64xf32> -> vector<8x64xf32>
    %c0_8 = arith.constant 0 : index
    %c0_9 = arith.constant 0 : index
    %9 = vector.load %arg5[%c0_8, %c0_9] : memref<1x64xf32, #tpu.memory_space<vmem>>, vector<1x64xf32>
    %10 = vector.broadcast %9 : vector<1x64xf32> to vector<8x64xf32>
    %11 = arith.addf %8, %10 : vector<8x64xf32>
    %c0_10 = arith.constant 0 : index
    %c0_11 = arith.constant 0 : index
    %12 = vector.load %arg6[%c0_10, %c0_11] : memref<8x64xf32, #tpu.memory_space<vmem>>, vector<8x64xf32>
    tpu.vector_store %arg6[%c0_10, %c0_11], %11 {strides = array<i32>} : memref<8x64xf32, #tpu.memory_space<vmem>>, vector<8x64xf32>,
    return
  }
  func.func @transform_0(%arg0: i32) -> (i32, i32) {
    %c0_i32 = arith.constant 0 : i32
    %c0_i32_0 = arith.constant 0 : i32
    return %arg0, %c0_i32 : i32, i32
  }
  func.func @transform_1(%arg0: i32) -> (i32, i32) {
    %c0_i32 = arith.constant 0 : i32
    %c0_i32_0 = arith.constant 0 : i32
    %c0_i32_1 = arith.constant 0 : i32
    return %c0_i32, %c0_i32_0 : i32, i32
  }
  func.func @transform_2(%arg0: i32) -> (i32, i32) {
    %c0_i32 = arith.constant 0 : i32
    %c0_i32_0 = arith.constant 0 : i32
    %c0_i32_1 = arith.constant 0 : i32
    return %c0_i32, %c0_i32_0 : i32, i32
  }
  func.func @transform_3(%arg0: i32) -> (i32, i32) {
    %c0_i32 = arith.constant 0 : i32
    %c0_i32_0 = arith.constant 0 : i32
    %c0_i32_1 = arith.constant 0 : i32
    return %c0_i32, %c0_i32_0 : i32, i32
  }
  func.func @transform_4(%arg0: i32) -> (i32, i32) {
    %c0_i32 = arith.constant 0 : i32
    %c0_i32_0 = arith.constant 0 : i32
    %c0_i32_1 = arith.constant 0 : i32
    return %c0_i32, %c0_i32_0 : i32, i32
  }
  func.func @transform_5(%arg0: i32) -> (i32, i32) {
    %c0_i32 = arith.constant 0 : i32
    %c0_i32_0 = arith.constant 0 : i32
    return %arg0, %c0_i32 : i32, i32
  }
}

</mosaic_0001>

<llo_original>
// kernel: tpu_custom_call.1
$region0: #{tpu_custom_call.1}
  #allocation0 [shape = 'u32[]', space=smem, size = 0x4, offset = 0x4, fixed_abs, tag = 'smem constant byte address 0x4 - core index']
  #allocation1 [shape = 'u32[72,128]{1,0:T(1,128)}', space=vmem, size = 0x9000, scoped, tag = 'internal scratch']
  %s0 = inlined_call_operand.vmem [shape: f32[8,128], index: 0, kind: input, shape index: {}]
  %s1 = inlined_call_operand.vmem [shape: f32[128,256], index: 1, kind: input, shape index: {}]
  %s2 = inlined_call_operand.vmem [shape: f32[1,256], index: 2, kind: input, shape index: {}]
  %s3 = inlined_call_operand.vmem [shape: f32[256,64], index: 3, kind: input, shape index: {}]
  %s4 = inlined_call_operand.vmem [shape: f32[1,64], index: 4, kind: input, shape index: {}]
  %s5 = inlined_call_operand.hbm [shape: f32[8,64], index: 5, kind: output, shape index: {}]
  %s6 = sld [smem:[#allocation0]]
  $region30: #{tpu_custom_call.1} parent=0
    _
  %s8 = ssub.s32 1, %s6
  %s9 = scalar_select 0, %s8, %s6
  $region1: #{tpu_custom_call.1} parent=0
    #allocation2 [shape = 'u8[4096]{0}', space=vmem, size = 0x1000, scoped, tag = 'output window, operand 0, single buffered']
    #allocation3 [shape = 's32[1]{0}', space=sflag, size = 0x4, scoped, tag = 'scoped memory for tpu_custom_call.1']
    %10 = vsyncpa [#allocation3], 0
    // Predicated region
    $region2: #{tpu_custom_call.1} parent=1 // pred_check
      _
    $region3: #{tpu_custom_call.1} parent=1 // pred_check_branch
      %12 = sbr.rel (0) target = $region5
    $region4: #{tpu_custom_call.1} parent=1 // pred_region
      _
    $region5: #{tpu_custom_call.1} parent=1 // pred_fallthru
      _
    // Predicated region
    $region6: #{tpu_custom_call.1} parent=1 // pred_check
      _
    $region7: #{tpu_custom_call.1} parent=1 // pred_check_branch
      %14 = sbr.rel (0) target = $region9
    $region8: #{tpu_custom_call.1} parent=1 // pred_region
      _
    $region9: #{tpu_custom_call.1} parent=1 // pred_fallthru
      _
    // Predicated region
    $region10: #{tpu_custom_call.1} parent=1 // pred_check
      _
    $region11: #{tpu_custom_call.1} parent=1 // pred_check_branch
      %16 = sbr.rel (0) target = $region13
    $region12: #{tpu_custom_call.1} parent=1 // pred_region
      _
    $region13: #{tpu_custom_call.1} parent=1 // pred_fallthru
      _
    // Predicated region
    $region14: #{tpu_custom_call.1} parent=1 // pred_check
      _
    $region15: #{tpu_custom_call.1} parent=1 // pred_check_branch
      %18 = sbr.rel (0) target = $region17
    $region16: #{tpu_custom_call.1} parent=1 // pred_region
      _
    $region17: #{tpu_custom_call.1} parent=1 // pred_fallthru
      _
    // Predicated region
    $region18: #{tpu_custom_call.1} parent=1 // pred_check
      _
    $region19: #{tpu_custom_call.1} parent=1 // pred_check_branch
      %20 = sbr.rel (0) target = $region21
    $region20: #{tpu_custom_call.1} parent=1 // pred_region
      _
    $region21: #{tpu_custom_call.1} parent=1 // pred_fallthru
      _
    %v21 = vld [vmem:[%s0] sm:$0xff]
    %v22 = vld [vmem:[%s1] sm:$0xff]
    %v23 = vld [vmem:[%s1 + $0x8] sm:$0xff]
    %v24 = vld [vmem:[%s1 + $0x10] sm:$0xff]
    %v25 = vld [vmem:[%s1 + $0x18] sm:$0xff]
    %v26 = vld [vmem:[%s1 + $0x20] sm:$0xff]
    %v27 = vld [vmem:[%s1 + $0x28] sm:$0xff]
    %v28 = vld [vmem:[%s1 + $0x30] sm:$0xff]
    %v29 = vld [vmem:[%s1 + $0x38] sm:$0xff]
    %v30 = vld [vmem:[%s1 + $0x40] sm:$0xff]
    %v31 = vld [vmem:[%s1 + $0x48] sm:$0xff]
    %v32 = vld [vmem:[%s1 + $0x50] sm:$0xff]
    %v33 = vld [vmem:[%s1 + $0x58] sm:$0xff]
    %v34 = vld [vmem:[%s1 + $0x60] sm:$0xff]
    %v35 = vld [vmem:[%s1 + $0x68] sm:$0xff]
    %v36 = vld [vmem:[%s1 + $0x70] sm:$0xff]
    %v37 = vld [vmem:[%s1 + $0x78] sm:$0xff]
    %v38 = vld [vmem:[%s1 + $0x80] sm:$0xff]
    %v39 = vld [vmem:[%s1 + $0x88] sm:$0xff]
    %v40 = vld [vmem:[%s1 + $0x90] sm:$0xff]
    %v41 = vld [vmem:[%s1 + $0x98] sm:$0xff]
    %v42 = vld [vmem:[%s1 + $0xa0] sm:$0xff]
    %v43 = vld [vmem:[%s1 + $0xa8] sm:$0xff]
    %v44 = vld [vmem:[%s1 + $0xb0] sm:$0xff]
    %v45 = vld [vmem:[%s1 + $0xb8] sm:$0xff]
    %v46 = vld [vmem:[%s1 + $0xc0] sm:$0xff]
    %v47 = vld [vmem:[%s1 + $0xc8] sm:$0xff]
    %v48 = vld [vmem:[%s1 + $0xd0] sm:$0xff]
    %v49 = vld [vmem:[%s1 + $0xd8] sm:$0xff]
    %v50 = vld [vmem:[%s1 + $0xe0] sm:$0xff]
    %v51 = vld [vmem:[%s1 + $0xe8] sm:$0xff]
    %v52 = vld [vmem:[%s1 + $0xf0] sm:$0xff]
    %v53 = vld [vmem:[%s1 + $0xf8] sm:$0xff]
    %v54 = vld [vmem:[%s2] sm:$0x3]
    %v56 = vperm.slane %v54, 0
    %v57 = vperm.slane %v54, 1
    %60 = vmatpush.msra.mxu0 %v52
    %61 = vmatpush.msra.mxu0 %v50
    %62 = vmatpush.msra.mxu0 %v48
    %63 = vmatpush.msra.mxu0 %v46
    %64 = vmatpush.msra.mxu0 %v44
    %65 = vmatpush.msra.mxu0 %v42
    %66 = vmatpush.msra.mxu0 %v40
    %67 = vmatpush.msra.mxu0 %v38
    %68 = vmatpush.msra.mxu0 %v36
    %69 = vmatpush.msra.mxu0 %v34
    %70 = vmatpush.msra.mxu0 %v32
    %71 = vmatpush.msra.mxu0 %v30
    %72 = vmatpush.msra.mxu0 %v28
    %73 = vmatpush.msra.mxu0 %v26
    %74 = vmatpush.msra.mxu0 %v24
    %75 = vmatpush.msra.mxu0 %v22
    %76 = vmatmul.f32.gmra.mxu0 %v21
    %v77 = vpop.f32.mrf.mxu0
    %v78 = vadd.f32 %v56, %v77
    %79 = vdwg.mxu0
    %80 = vmatpush.msra.mxu0 %v53
    %81 = vmatpush.msra.mxu0 %v51
    %82 = vmatpush.msra.mxu0 %v49
    %83 = vmatpush.msra.mxu0 %v47
    %84 = vmatpush.msra.mxu0 %v45
    %85 = vmatpush.msra.mxu0 %v43
    %86 = vmatpush.msra.mxu0 %v41
    %87 = vmatpush.msra.mxu0 %v39
    %88 = vmatpush.msra.mxu0 %v37
    %89 = vmatpush.msra.mxu0 %v35
    %90 = vmatpush.msra.mxu0 %v33
    %91 = vmatpush.msra.mxu0 %v31
    %92 = vmatpush.msra.mxu0 %v29
    %93 = vmatpush.msra.mxu0 %v27
    %94 = vmatpush.msra.mxu0 %v25
    %95 = vmatpush.msra.mxu0 %v23
    %96 = vmatmul.f32.gmra.mxu0 %v21
    %v97 = vpop.f32.mrf.mxu0
    %v98 = vadd.f32 %v57, %v97
    %99 = vdwg.mxu0
    %v100 = vtanh.pop %v78
    %v101 = vtanh.pop %v98
    %v102 = vld [vmem:[%s3] sm:$0xff]
    %v103 = vld [vmem:[%s3 + $0x8] sm:$0xff]
    %v104 = vld [vmem:[%s3 + $0x10] sm:$0xff]
    %v105 = vld [vmem:[%s3 + $0x18] sm:$0xff]
    %v106 = vld [vmem:[%s3 + $0x20] sm:$0xff]
    %v107 = vld [vmem:[%s3 + $0x28] sm:$0xff]
    %v108 = vld [vmem:[%s3 + $0x30] sm:$0xff]
    %v109 = vld [vmem:[%s3 + $0x38] sm:$0xff]
    %v110 = vld [vmem:[%s3 + $0x40] sm:$0xff]
    %v111 = vld [vmem:[%s3 + $0x48] sm:$0xff]
    %v112 = vld [vmem:[%s3 + $0x50] sm:$0xff]
    %v113 = vld [vmem:[%s3 + $0x58] sm:$0xff]
    %v114 = vld [vmem:[%s3 + $0x60] sm:$0xff]
    %v115 = vld [vmem:[%s3 + $0x68] sm:$0xff]
    %v116 = vld [vmem:[%s3 + $0x70] sm:$0xff]
    %v117 = vld [vmem:[%s3 + $0x78] sm:$0xff]
    %v118 = vld [vmem:[%s3 + $0x80] sm:$0xff]
    %v119 = vld [vmem:[%s3 + $0x88] sm:$0xff]
    %v120 = vld [vmem:[%s3 + $0x90] sm:$0xff]
    %v121 = vld [vmem:[%s3 + $0x98] sm:$0xff]
    %v122 = vld [vmem:[%s3 + $0xa0] sm:$0xff]
    %v123 = vld [vmem:[%s3 + $0xa8] sm:$0xff]
    %v124 = vld [vmem:[%s3 + $0xb0] sm:$0xff]
    %v125 = vld [vmem:[%s3 + $0xb8] sm:$0xff]
    %v126 = vld [vmem:[%s3 + $0xc0] sm:$0xff]
    %v127 = vld [vmem:[%s3 + $0xc8] sm:$0xff]
    %v128 = vld [vmem:[%s3 + $0xd0] sm:$0xff]
    %v129 = vld [vmem:[%s3 + $0xd8] sm:$0xff]
    %v130 = vld [vmem:[%s3 + $0xe0] sm:$0xff]
    %v131 = vld [vmem:[%s3 + $0xe8] sm:$0xff]
    %v132 = vld [vmem:[%s3 + $0xf0] sm:$0xff]
    %v133 = vld [vmem:[%s3 + $0xf8] sm:$0xff]
    %v134 = vld [vmem:[%s4] sm:$0x1]
    %v136 = vperm.slane %v134, 0
    %138 = vmatpush.msra.mxu0 %v117
    %139 = vmatpush.msra.mxu0 %v116
    %140 = vmatpush.msra.mxu0 %v115
    %141 = vmatpush.msra.mxu0 %v114
    %142 = vmatpush.msra.mxu0 %v113
    %143 = vmatpush.msra.mxu0 %v112
    %144 = vmatpush.msra.mxu0 %v111
    %145 = vmatpush.msra.mxu0 %v110
    %146 = vmatpush.msra.mxu0 %v109
    %147 = vmatpush.msra.mxu0 %v108
    %148 = vmatpush.msra.mxu0 %v107
    %149 = vmatpush.msra.mxu0 %v106
    %150 = vmatpush.msra.mxu0 %v105
    %151 = vmatpush.msra.mxu0 %v104
    %152 = vmatpush.msra.mxu0 %v103
    %153 = vmatpush.msra.mxu0 %v102
    %154 = vmatmul.f32.gmra.mxu0 %v100
    %v155 = vpop.f32.mrf.mxu0
    %v156 = vadd.f32 %v136, %v155
    %157 = vdwg.mxu0
    %158 = vmatpush.msra.mxu0 %v133
    %159 = vmatpush.msra.mxu0 %v132
    %160 = vmatpush.msra.mxu0 %v131
    %161 = vmatpush.msra.mxu0 %v130
    %162 = vmatpush.msra.mxu0 %v129
    %163 = vmatpush.msra.mxu0 %v128
    %164 = vmatpush.msra.mxu0 %v127
    %165 = vmatpush.msra.mxu0 %v126
    %166 = vmatpush.msra.mxu0 %v125
    %167 = vmatpush.msra.mxu0 %v124
    %168 = vmatpush.msra.mxu0 %v123
    %169 = vmatpush.msra.mxu0 %v122
    %170 = vmatpush.msra.mxu0 %v121
    %171 = vmatpush.msra.mxu0 %v120
    %172 = vmatpush.msra.mxu0 %v119
    %173 = vmatpush.msra.mxu0 %v118
    %174 = vmatmul.f32.gmra.mxu0 %v101
    %v175 = vpop.f32.mrf.mxu0
    %v176 = vadd.f32 %v156, %v175
    %177 = vdwg.mxu0
    %vm178 = vcmask 523264
    %179 = vst.msk [vmem:[#allocation2] sm:$0xff] %vm178, %v176
    // Predicated region
    $region22: #{tpu_custom_call.1} parent=1 // pred_check
      _
    $region23: #{tpu_custom_call.1} parent=1 // pred_check_branch
      %181 = sbr.rel (0) target = $region25
    $region24: #{tpu_custom_call.1} parent=1 // pred_region
      %183 = vsyncadd [#allocation3], 0
      %s185 = sshll.u32 [#allocation2], 4
      %s186 = int_to_ptr.vmem [resolvable:$true] %s185
      %s187 = sshll.u32 %s5, 4
      %s188 = int_to_ptr.hbm [resolvable:$true] %s187
      %190 = dma.vmem_to_hbm [thread:$0]  %s186, 128, %s188, [#allocation3]
    $region25: #{tpu_custom_call.1} parent=1 // pred_fallthru
      _
    // Predicated region
    $region26: #{tpu_custom_call.1} parent=1 // pred_check
      _
    $region27: #{tpu_custom_call.1} parent=1 // pred_check_branch
      %192 = sbr.rel (0) target = $region29
    $region28: #{tpu_custom_call.1} parent=1 // pred_region
      %194 = dma.done [#allocation3], 128
    $region29: #{tpu_custom_call.1} parent=1 // pred_fallthru
      _
    %195 = vsyncpa [#allocation3], 1

</llo_original>
